<compile_context>
chip_gen: v7x
topology: tpu7x:2x2x1
jax: 0.10.0
libtpu: 0.0.40
codegen_flags: <defaults>
</compile_context>

<pallas_src>
import functools

import jax
import jax.numpy as jnp
from jax import lax
from jax.experimental import pallas as pl
from jax.experimental.pallas import tpu as pltpu


def _toeplitz_conv_weights(w_oihw, W):
    """OIHW (Cout, Cin, 3, 3) conv weights -> (3, W*Cin, W*Cout) block-Toeplitz
    matmul slabs.  T[kh][(w+kw-1)*Cin + ci, w*Cout + co] = w[co, ci, kh, kw];
    entries whose source column (w+kw-1) falls outside [0, W) stay zero, which
    implements padding=1 horizontally."""
    Cout, Cin, KH, KW = w_oihw.shape
    w_hwio = jnp.transpose(w_oihw, (2, 3, 1, 0))  # (KH, KW, Cin, Cout)
    slabs = []
    for kh in range(KH):
        t = jnp.zeros((W * Cin, W * Cout), w_oihw.dtype)
        for kw in range(KW):
            band = jnp.eye(W, k=1 - kw, dtype=w_oihw.dtype)  # [src_col, dst_col]
            t = t + jnp.kron(band, w_hwio[kh, kw])
        slabs.append(t)
    return jnp.stack(slabs, axis=0)


def _double_conv_kernel(x_ref, w1_ref, w2_ref, mask_ref, o_ref, ypad_ref, *,
                        n_imgs, img_rows, pad_rows):
    # x_ref   : (M, W*Cin)   M = n_imgs*pad_rows; per image: row 0 = zero halo,
    #                        rows 1..H = data, rows H+1..Hp-1 = zeros (pre-padded).
    # w1_ref  : (3, W*Cin,  W*Cmid)  block-Toeplitz conv1 slabs (one per kh)
    # w2_ref  : (3, W*Cmid, W*Cout)  block-Toeplitz conv2 slabs
    # mask_ref: (M-2, W*Cmid)  1.0 on valid conv1 rows, 0.0 on halo/tail rows
    # o_ref   : (n_imgs*H, W*Cout)   lane-dense output slab
    # ypad_ref: VMEM (M, W*Cmid)     intermediate (never leaves VMEM)
    H, Hp, B = img_rows, pad_rows, n_imgs
    M = x_ref.shape[0]

    # ---- conv1 + ReLU: three fat, fully aligned matmuls over the whole slab ----
    xs = x_ref[...]
    p0 = jnp.dot(xs, w1_ref[0], preferred_element_type=jnp.float32)
    p1 = jnp.dot(xs, w1_ref[1], preferred_element_type=jnp.float32)
    p2 = jnp.dot(xs, w1_ref[2], preferred_element_type=jnp.float32)
    # row j of y = conv1 output at stacked row j (valid for j%Hp < H); the mask
    # zeroes the rows that become the vertical halo / tail of the intermediate.
    y = jnp.maximum(p0[0:M - 2] + p1[1:M - 1] + p2[2:M], 0.0) * mask_ref[...]

    # ---- re-pad intermediate in VMEM: one masked store + two halo-row zeros ----
    zrow = jnp.zeros((1, ypad_ref.shape[1]), ypad_ref.dtype)
    ypad_ref[0:1, :] = zrow          # top halo of first image
    ypad_ref[M - 1:M, :] = zrow      # last tail row of last image
    ypad_ref[1:M - 1, :] = y.astype(ypad_ref.dtype)

    # ---- conv2 + ReLU ----
    yq = ypad_ref[...]
    q0 = jnp.dot(yq, w2_ref[0], preferred_element_type=jnp.float32)
    q1 = jnp.dot(yq, w2_ref[1], preferred_element_type=jnp.float32)
    q2 = jnp.dot(yq, w2_ref[2], preferred_element_type=jnp.float32)
    out = jnp.maximum(q0[0:M - 2] + q1[1:M - 1] + q2[2:M], 0.0)

    # ---- store the H valid rows of each image (aligned src/dst slices) ----
    for b in range(B):
        o_ref[b * H:(b + 1) * H, :] = out[b * Hp:b * Hp + H].astype(o_ref.dtype)


def double_conv(x_nchw, w1_oihw, w2_oihw, *, block_batch=8,
                mxu_dtype=jnp.float32):
    """PyTorch-equivalent DoubleConv forward.  x_nchw: (N, Cin, H, W) float32."""
    N, Cin, H, W = x_nchw.shape
    Cmid = w1_oihw.shape[0]
    Cout = w2_oihw.shape[0]
    K1, K2, K3 = W * Cin, W * Cmid, W * Cout

    Hp = ((H + 2 + 7) // 8) * 8              # padded rows per image (8-aligned)
    Bblk = max(1, min(block_batch, N))       # images per grid step (fattens M)
    Ngroups = -(-N // Bblk)
    Npad = Ngroups * Bblk
    M = Bblk * Hp

    # NCHW -> (N, H, W*Cin) channels-interleaved rows; pre-pad batch + vertical
    # halos/tail once in the wrapper (no in-kernel input copy / zero-fill).
    x_rows = jnp.transpose(x_nchw, (0, 2, 3, 1)).reshape(N, H, K1)
    x_rows = jnp.pad(x_rows, ((0, Npad - N), (1, Hp - H - 1), (0, 0)))
    x_stack = x_rows.reshape(Ngroups, M, K1).astype(mxu_dtype)

    # Matmul-ready weight slabs, resident in VMEM across the whole grid.
    t1 = _toeplitz_conv_weights(w1_oihw, W).astype(mxu_dtype)   # (3, K1, K2)
    t2 = _toeplitz_conv_weights(w2_oihw, W).astype(mxu_dtype)   # (3, K2, K3)

    # mask[j] = 1 iff stacked row j holds a valid conv1 output (j % Hp < H).
    j = jnp.arange(M - 2)
    mask = ((j % Hp) < H).astype(jnp.float32)[:, None] * jnp.ones((1, K2),
                                                                  jnp.float32)

    kernel = functools.partial(_double_conv_kernel,
                               n_imgs=Bblk, img_rows=H, pad_rows=Hp)

    out_stack = pl.pallas_call(
        kernel,
        out_shape=jax.ShapeDtypeStruct((Ngroups, Bblk * H, K3), x_nchw.dtype),
        grid_spec=pltpu.PrefetchScalarGridSpec(
            num_scalar_prefetch=0,
            grid=(Ngroups,),
            in_specs=[
                pl.BlockSpec((None, M, K1), lambda g: (g, 0, 0)),
                pl.BlockSpec((3, K1, K2), lambda g: (0, 0, 0)),
                pl.BlockSpec((3, K2, K3), lambda g: (0, 0, 0)),
                pl.BlockSpec((M - 2, K2), lambda g: (0, 0)),
            ],
            out_specs=pl.BlockSpec((None, Bblk * H, K3), lambda g: (g, 0, 0)),
            scratch_shapes=[pltpu.VMEM((M, K2), mxu_dtype)],
        ),
        compiler_params=pltpu.CompilerParams(
            dimension_semantics=("parallel",)),
    )(x_stack, t1, t2, mask)

    out = out_stack.reshape(Npad, H, W, Cout)[:N]
    return jnp.transpose(out, (0, 3, 1, 2))


def _reference_double_conv(x_nchw, w1_oihw, w2_oihw):
    """Pure-JAX reference (lax conv) for correctness checking."""
    dn = lax.conv_dimension_numbers(x_nchw.shape, w1_oihw.shape,
                                    ("NCHW", "OIHW", "NCHW"))
    y = lax.conv_general_dilated(x_nchw, w1_oihw, (1, 1), "SAME",
                                 dimension_numbers=dn)
    y = jnp.maximum(y, 0.0)
    y = lax.conv_general_dilated(y, w2_oihw, (1, 1), "SAME",
                                 dimension_numbers=dn)
    return jnp.maximum(y, 0.0)


if __name__ == "__main__":
    # Module config: Doubleconv(in_channels=4, out_channels=8) -> mid_channels=8
    N, Cin, H, W = 2, 4, 16, 16
    Cmid, Cout = 8, 8

    key = jax.random.PRNGKey(0)
    kx, kw1, kw2 = jax.random.split(key, 3)
    x = jax.random.normal(kx, (N, Cin, H, W), dtype=jnp.float32)
    b1 = (1.0 / (Cin * 9)) ** 0.5
    b2 = (1.0 / (Cmid * 9)) ** 0.5
    w1 = jax.random.uniform(kw1, (Cmid, Cin, 3, 3), jnp.float32, -b1, b1)
    w2 = jax.random.uniform(kw2, (Cout, Cmid, 3, 3), jnp.float32, -b2, b2)

    out = jax.block_until_ready(jax.jit(double_conv)(x, w1, w2))

    ref = _reference_double_conv(x, w1, w2)
    assert out.shape == (N, Cout, H, W), out.shape
    err = float(jnp.max(jnp.abs(out - ref)))
    assert jnp.allclose(out, ref, atol=2e-5, rtol=2e-5), err

    print("KERNEL_OK")
</pallas_src>

<mosaic_0001>
module attributes {stable_mosaic.version = 11 : i64} {
  func.func @_double_conv_kernel(%arg0: i32, %arg1: memref<1x48x64xf32, #tpu.memory_space<vmem>>, %arg2: memref<3x64x128xf32, #tpu.memory_space<vmem>>, %arg3: memref<3x128x128xf32, #tpu.memory_space<vmem>>, %arg4: memref<46x128xf32, #tpu.memory_space<vmem>>, %arg5: memref<1x32x128xf32, #tpu.memory_space<vmem>>, %arg6: memref<48x128xf32, #tpu.memory_space<vmem>>) attributes {dimension_semantics = [#tpu.dimension_semantics<parallel>], iteration_bounds = array<i64: 1>, scalar_prefetch = 0 : i64, scratch_operands = 1 : i64, tpu.core_type = #tpu.core_type<tc>, window_params = [{transform_indices = @transform_0, window_bounds = array<i64: 1, 48, 64>}, {pipeline_mode = #tpu.pipeline_mode<synchronous>, transform_indices = @transform_1, window_bounds = array<i64: 3, 64, 128>}, {pipeline_mode = #tpu.pipeline_mode<synchronous>, transform_indices = @transform_2, window_bounds = array<i64: 3, 128, 128>}, {pipeline_mode = #tpu.pipeline_mode<synchronous>, transform_indices = @transform_3, window_bounds = array<i64: 46, 128>}, {transform_indices = @transform_4, window_bounds = array<i64: 1, 32, 128>}]} {
    %c0 = arith.constant 0 : index
    %c0_0 = arith.constant 0 : index
    %c0_1 = arith.constant 0 : index
    %0 = vector.load %arg1[%c0, %c0_0, %c0_1] : memref<1x48x64xf32, #tpu.memory_space<vmem>>, vector<1x48x64xf32>
    %1 = vector.shape_cast %0 : vector<1x48x64xf32> to vector<48x64xf32>
    %c0_2 = arith.constant 0 : index
    %c0_3 = arith.constant 0 : index
    %c0_4 = arith.constant 0 : index
    %2 = vector.load %arg2[%c0_2, %c0_3, %c0_4] : memref<3x64x128xf32, #tpu.memory_space<vmem>>, vector<1x64x128xf32>
    %3 = vector.shape_cast %2 : vector<1x64x128xf32> to vector<64x128xf32>
    %cst = arith.constant dense<0.000000e+00> : vector<48x128xf32>
    %4 = tpu.matmul %1, %3, %cst {dimension_numbers = #tpu.dot_dimension_numbers<[1], [0], [0], [1], [0, 0, 1, 1], [], []>} : vector<48x64xf32>, vector<64x128xf32>, vector<48x128xf32> -> vector<48x128xf32>
    %c1 = arith.constant 1 : index
    %c0_5 = arith.constant 0 : index
    %c0_6 = arith.constant 0 : index
    %5 = vector.load %arg2[%c1, %c0_5, %c0_6] : memref<3x64x128xf32, #tpu.memory_space<vmem>>, vector<1x64x128xf32>
    %6 = vector.shape_cast %5 : vector<1x64x128xf32> to vector<64x128xf32>
    %cst_7 = arith.constant dense<0.000000e+00> : vector<48x128xf32>
    %7 = tpu.matmul %1, %6, %cst_7 {dimension_numbers = #tpu.dot_dimension_numbers<[1], [0], [0], [1], [0, 0, 1, 1], [], []>} : vector<48x64xf32>, vector<64x128xf32>, vector<48x128xf32> -> vector<48x128xf32>
    %c2 = arith.constant 2 : index
    %c0_8 = arith.constant 0 : index
    %c0_9 = arith.constant 0 : index
    %8 = vector.load %arg2[%c2, %c0_8, %c0_9] : memref<3x64x128xf32, #tpu.memory_space<vmem>>, vector<1x64x128xf32>
    %9 = vector.shape_cast %8 : vector<1x64x128xf32> to vector<64x128xf32>
    %cst_10 = arith.constant dense<0.000000e+00> : vector<48x128xf32>
    %10 = tpu.matmul %1, %9, %cst_10 {dimension_numbers = #tpu.dot_dimension_numbers<[1], [0], [0], [1], [0, 0, 1, 1], [], []>} : vector<48x64xf32>, vector<64x128xf32>, vector<48x128xf32> -> vector<48x128xf32>
    %11 = vector.extract_strided_slice %4 {offsets = [0, 0], sizes = [46, 128], strides = [1, 1]} : vector<48x128xf32> to vector<46x128xf32>
    %12 = vector.extract_strided_slice %7 {offsets = [1, 0], sizes = [46, 128], strides = [1, 1]} : vector<48x128xf32> to vector<46x128xf32>
    %13 = arith.addf %11, %12 : vector<46x128xf32>
    %14 = vector.extract_strided_slice %10 {offsets = [2, 0], sizes = [46, 128], strides = [1, 1]} : vector<48x128xf32> to vector<46x128xf32>
    %15 = arith.addf %13, %14 : vector<46x128xf32>
    %cst_11 = arith.constant 0.000000e+00 : f32
    %16 = vector.broadcast %cst_11 : f32 to vector<46x128xf32>
    %17 = arith.maximumf %15, %16 : vector<46x128xf32>
    %c0_12 = arith.constant 0 : index
    %c0_13 = arith.constant 0 : index
    %18 = vector.load %arg4[%c0_12, %c0_13] : memref<46x128xf32, #tpu.memory_space<vmem>>, vector<46x128xf32>
    %19 = arith.mulf %17, %18 : vector<46x128xf32>
    %cst_14 = arith.constant 0.000000e+00 : f32
    %20 = vector.broadcast %cst_14 : f32 to vector<1x128xf32>
    %c0_15 = arith.constant 0 : index
    %c0_16 = arith.constant 0 : index
    %21 = vector.load %arg6[%c0_15, %c0_16] : memref<48x128xf32, #tpu.memory_space<vmem>>, vector<1x128xf32>
    tpu.vector_store %arg6[%c0_15, %c0_16], %20 {strides = array<i32>} : memref<48x128xf32, #tpu.memory_space<vmem>>, vector<1x128xf32>,
    %c47 = arith.constant 47 : index
    %c0_17 = arith.constant 0 : index
    %22 = vector.load %arg6[%c47, %c0_17] : memref<48x128xf32, #tpu.memory_space<vmem>>, vector<1x128xf32>
    tpu.vector_store %arg6[%c47, %c0_17], %20 {strides = array<i32>} : memref<48x128xf32, #tpu.memory_space<vmem>>, vector<1x128xf32>,
    %c1_18 = arith.constant 1 : index
    %c0_19 = arith.constant 0 : index
    %23 = vector.load %arg6[%c1_18, %c0_19] : memref<48x128xf32, #tpu.memory_space<vmem>>, vector<46x128xf32>
    tpu.vector_store %arg6[%c1_18, %c0_19], %19 {strides = array<i32>} : memref<48x128xf32, #tpu.memory_space<vmem>>, vector<46x128xf32>,
    %c0_20 = arith.constant 0 : index
    %c0_21 = arith.constant 0 : index
    %24 = vector.load %arg6[%c0_20, %c0_21] : memref<48x128xf32, #tpu.memory_space<vmem>>, vector<48x128xf32>
    %c0_22 = arith.constant 0 : index
    %c0_23 = arith.constant 0 : index
    %c0_24 = arith.constant 0 : index
    %25 = vector.load %arg3[%c0_22, %c0_23, %c0_24] : memref<3x128x128xf32, #tpu.memory_space<vmem>>, vector<1x128x128xf32>
    %26 = vector.shape_cast %25 : vector<1x128x128xf32> to vector<128x128xf32>
    %cst_25 = arith.constant dense<0.000000e+00> : vector<48x128xf32>
    %27 = tpu.matmul %24, %26, %cst_25 {dimension_numbers = #tpu.dot_dimension_numbers<[1], [0], [0], [1], [0, 0, 1, 1], [], []>} : vector<48x128xf32>, vector<128x128xf32>, vector<48x128xf32> -> vector<48x128xf32>
    %c1_26 = arith.constant 1 : index
    %c0_27 = arith.constant 0 : index
    %c0_28 = arith.constant 0 : index
    %28 = vector.load %arg3[%c1_26, %c0_27, %c0_28] : memref<3x128x128xf32, #tpu.memory_space<vmem>>, vector<1x128x128xf32>
    %29 = vector.shape_cast %28 : vector<1x128x128xf32> to vector<128x128xf32>
    %cst_29 = arith.constant dense<0.000000e+00> : vector<48x128xf32>
    %30 = tpu.matmul %24, %29, %cst_29 {dimension_numbers = #tpu.dot_dimension_numbers<[1], [0], [0], [1], [0, 0, 1, 1], [], []>} : vector<48x128xf32>, vector<128x128xf32>, vector<48x128xf32> -> vector<48x128xf32>
    %c2_30 = arith.constant 2 : index
    %c0_31 = arith.constant 0 : index
    %c0_32 = arith.constant 0 : index
    %31 = vector.load %arg3[%c2_30, %c0_31, %c0_32] : memref<3x128x128xf32, #tpu.memory_space<vmem>>, vector<1x128x128xf32>
    %32 = vector.shape_cast %31 : vector<1x128x128xf32> to vector<128x128xf32>
    %cst_33 = arith.constant dense<0.000000e+00> : vector<48x128xf32>
    %33 = tpu.matmul %24, %32, %cst_33 {dimension_numbers = #tpu.dot_dimension_numbers<[1], [0], [0], [1], [0, 0, 1, 1], [], []>} : vector<48x128xf32>, vector<128x128xf32>, vector<48x128xf32> -> vector<48x128xf32>
    %34 = vector.extract_strided_slice %27 {offsets = [0, 0], sizes = [46, 128], strides = [1, 1]} : vector<48x128xf32> to vector<46x128xf32>
    %35 = vector.extract_strided_slice %30 {offsets = [1, 0], sizes = [46, 128], strides = [1, 1]} : vector<48x128xf32> to vector<46x128xf32>
    %36 = arith.addf %34, %35 : vector<46x128xf32>
    %37 = vector.extract_strided_slice %33 {offsets = [2, 0], sizes = [46, 128], strides = [1, 1]} : vector<48x128xf32> to vector<46x128xf32>
    %38 = arith.addf %36, %37 : vector<46x128xf32>
    %cst_34 = arith.constant 0.000000e+00 : f32
    %39 = vector.broadcast %cst_34 : f32 to vector<46x128xf32>
    %40 = arith.maximumf %38, %39 : vector<46x128xf32>
    %41 = vector.extract_strided_slice %40 {offsets = [0, 0], sizes = [16, 128], strides = [1, 1]} : vector<46x128xf32> to vector<16x128xf32>
    %c0_35 = arith.constant 0 : index
    %c0_36 = arith.constant 0 : index
    %c0_37 = arith.constant 0 : index
    %42 = vector.load %arg5[%c0_35, %c0_36, %c0_37] : memref<1x32x128xf32, #tpu.memory_space<vmem>>, vector<1x16x128xf32>
    %43 = vector.shape_cast %42 : vector<1x16x128xf32> to vector<16x128xf32>
    %44 = vector.shape_cast %41 : vector<16x128xf32> to vector<1x16x128xf32>
    tpu.vector_store %arg5[%c0_35, %c0_36, %c0_37], %44 {strides = array<i32>} : memref<1x32x128xf32, #tpu.memory_space<vmem>>, vector<1x16x128xf32>,
    %45 = vector.extract_strided_slice %40 {offsets = [24, 0], sizes = [16, 128], strides = [1, 1]} : vector<46x128xf32> to vector<16x128xf32>
    %c0_38 = arith.constant 0 : index
    %c16 = arith.constant 16 : index
    %c0_39 = arith.constant 0 : index
    %46 = vector.load %arg5[%c0_38, %c16, %c0_39] : memref<1x32x128xf32, #tpu.memory_space<vmem>>, vector<1x16x128xf32>
    %47 = vector.shape_cast %46 : vector<1x16x128xf32> to vector<16x128xf32>
    %48 = vector.shape_cast %45 : vector<16x128xf32> to vector<1x16x128xf32>
    tpu.vector_store %arg5[%c0_38, %c16, %c0_39], %48 {strides = array<i32>} : memref<1x32x128xf32, #tpu.memory_space<vmem>>, vector<1x16x128xf32>,
    return
  }
  func.func @transform_0(%arg0: i32) -> (i32, i32, i32) {
    %c0_i32 = arith.constant 0 : i32
    %c0_i32_0 = arith.constant 0 : i32
    %c0_i32_1 = arith.constant 0 : i32
    return %arg0, %c0_i32, %c0_i32_0 : i32, i32, i32
  }
  func.func @transform_1(%arg0: i32) -> (i32, i32, i32) {
    %c0_i32 = arith.constant 0 : i32
    %c0_i32_0 = arith.constant 0 : i32
    %c0_i32_1 = arith.constant 0 : i32
    %c0_i32_2 = arith.constant 0 : i32
    return %c0_i32, %c0_i32_0, %c0_i32_1 : i32, i32, i32
  }
  func.func @transform_2(%arg0: i32) -> (i32, i32, i32) {
    %c0_i32 = arith.constant 0 : i32
    %c0_i32_0 = arith.constant 0 : i32
    %c0_i32_1 = arith.constant 0 : i32
    %c0_i32_2 = arith.constant 0 : i32
    return %c0_i32, %c0_i32_0, %c0_i32_1 : i32, i32, i32
  }
  func.func @transform_3(%arg0: i32) -> (i32, i32) {
    %c0_i32 = arith.constant 0 : i32
    %c0_i32_0 = arith.constant 0 : i32
    %c0_i32_1 = arith.constant 0 : i32
    return %c0_i32, %c0_i32_0 : i32, i32
  }
  func.func @transform_4(%arg0: i32) -> (i32, i32, i32) {
    %c0_i32 = arith.constant 0 : i32
    %c0_i32_0 = arith.constant 0 : i32
    %c0_i32_1 = arith.constant 0 : i32
    return %arg0, %c0_i32, %c0_i32_0 : i32, i32, i32
  }
}

</mosaic_0001>

<llo_original>
// kernel: mul.33
$region0: #{mul.33}
  #allocation0 [shape = 's32[1]{0}', space=sflag, size = 0x4, scoped, tag = 'scoped memory for mul.33']
  %s0 = inlined_call_operand.vmem [shape: f32[46], index: 0, kind: input, shape index: {}]
  %s1 = inlined_call_operand.vmem [shape: f32[46,128], index: 1, kind: output, shape index: {}]
  // Predicated region
  $region2: #{mul.33} parent=0 // pred_check
    _
  $region3: #{mul.33} parent=0 // pred_check_branch
    %3 = sbr.rel (0) target = $region5
  $region4: #{mul.33} parent=0 // pred_region
    _
  $region5: #{mul.33} parent=0 // pred_fallthru
    _
  %v4 = vld [vmem:[%s0] ss:$0 sm:$0xff]
  %6 = vbcast.lane.b32.xlu0 %v4, 256
  %v7 = vpop.permute.xlu0 %6
  %8 = vst [vmem:[%s1] sm:$0xff] %v7
  %v9 = vld [vmem:[%s0] ss:$0 sm:$0xff]
  %s11 = sor.u32 256, 8
  %12 = vbcast.lane.b32.xlu0 %v9, %s11
  %v13 = vpop.permute.xlu0 %12
  %s14 = scalar_lea.vmem %s1, 8
  %15 = vst [vmem:[%s14] sm:$0xff] %v13
  %v16 = vld [vmem:[%s0] ss:$0 sm:$0xff]
  %s18 = sor.u32 256, 16
  %19 = vbcast.lane.b32.xlu0 %v16, %s18
  %v20 = vpop.permute.xlu0 %19
  %s21 = scalar_lea.vmem %s1, 16
  %22 = vst [vmem:[%s21] sm:$0xff] %v20
  %v23 = vld [vmem:[%s0] ss:$0 sm:$0xff]
  %s25 = sor.u32 256, 24
  %26 = vbcast.lane.b32.xlu0 %v23, %s25
  %v27 = vpop.permute.xlu0 %26
  %s28 = scalar_lea.vmem %s1, 24
  %29 = vst [vmem:[%s28] sm:$0xff] %v27
  %v30 = vld [vmem:[%s0] ss:$0 sm:$0xff]
  %s32 = sor.u32 256, 32
  %33 = vbcast.lane.b32.xlu0 %v30, %s32
  %v34 = vpop.permute.xlu0 %33
  %s35 = scalar_lea.vmem %s1, 32
  %36 = vst [vmem:[%s35] sm:$0xff] %v34
  %v37 = vld [vmem:[%s0] ss:$0 sm:$0xff]
  %s39 = sor.u32 256, 40
  %40 = vbcast.lane.b32.xlu0 %v37, %s39
  %v41 = vpop.permute.xlu0 %40
  %s42 = scalar_lea.vmem %s1, 40
  %43 = vst [vmem:[%s42] sm:$0xff] %v41

// kernel: double_conv.1
$region0: #{double_conv.1}
  #allocation0 [shape = 'u32[]', space=smem, size = 0x4, offset = 0x4, fixed_abs, tag = 'smem constant byte address 0x4 - core index']
  #allocation1 [shape = 'u32[144,128]{1,0:T(1,128)}', space=vmem, size = 0x12000, scoped, tag = 'internal scratch']
  #allocation2 [shape = 'f32[48,128]{1,0:T(8,128)}', space=vmem, size = 0x6000, scoped, tag = 'scratch operand']
  %s0 = inlined_call_operand.vmem [shape: f32[1,48,64], index: 0, kind: input, shape index: {}]
  %s1 = inlined_call_operand.vmem [shape: f32[3,64,128], index: 1, kind: input, shape index: {}]
  %s2 = inlined_call_operand.vmem [shape: f32[3,128,128], index: 2, kind: input, shape index: {}]
  %s3 = inlined_call_operand.vmem [shape: f32[46,128], index: 3, kind: input, shape index: {}]
  %s4 = inlined_call_operand.vmem [shape: f32[1,32,128], index: 4, kind: output, shape index: {}]
  %s5 = sld [smem:[#allocation0]]
  $region26: #{double_conv.1} parent=0
    _
  %s7 = ssub.s32 1, %s5
  %s8 = scalar_select 0, %s7, %s5
  // Predicated region
  $region2: #{double_conv.1} parent=0 // pred_check
    _
  $region3: #{double_conv.1} parent=0 // pred_check_branch
    %10 = sbr.rel (0) target = $region5
  $region4: #{double_conv.1} parent=0 // pred_region
    _
  $region5: #{double_conv.1} parent=0 // pred_fallthru
    _
  // Predicated region
  $region6: #{double_conv.1} parent=0 // pred_check
    _
  $region7: #{double_conv.1} parent=0 // pred_check_branch
    %12 = sbr.rel (0) target = $region9
  $region8: #{double_conv.1} parent=0 // pred_region
    _
  $region9: #{double_conv.1} parent=0 // pred_fallthru
    _
  // Predicated region
  $region10: #{double_conv.1} parent=0 // pred_check
    _
  $region11: #{double_conv.1} parent=0 // pred_check_branch
    %14 = sbr.rel (0) target = $region13
  $region12: #{double_conv.1} parent=0 // pred_region
    _
  $region13: #{double_conv.1} parent=0 // pred_fallthru
    _
  // Predicated region
  $region14: #{double_conv.1} parent=0 // pred_check
    _
  $region15: #{double_conv.1} parent=0 // pred_check_branch
    %16 = sbr.rel (0) target = $region17
  $region16: #{double_conv.1} parent=0 // pred_region
    _
  $region17: #{double_conv.1} parent=0 // pred_fallthru
    _
  %v17 = vld [vmem:[%s0] sm:$0xff]
  %v18 = vld [vmem:[%s0 + $0x8] sm:$0xff]
  %v19 = vld [vmem:[%s0 + $0x10] sm:$0xff]
  %v20 = vld [vmem:[%s0 + $0x18] sm:$0xff]
  %v21 = vld [vmem:[%s0 + $0x20] sm:$0xff]
  %v22 = vld [vmem:[%s0 + $0x28] sm:$0xff]
  %v23 = vld [vmem:[%s1] sm:$0xff]
  %v24 = vld [vmem:[%s1 + $0x8] sm:$0xff]
  %v25 = vld [vmem:[%s1 + $0x10] sm:$0xff]
  %v26 = vld [vmem:[%s1 + $0x18] sm:$0xff]
  %v27 = vld [vmem:[%s1 + $0x20] sm:$0xff]
  %v28 = vld [vmem:[%s1 + $0x28] sm:$0xff]
  %v29 = vld [vmem:[%s1 + $0x30] sm:$0xff]
  %v30 = vld [vmem:[%s1 + $0x38] sm:$0xff]
  %vm31 = vcmask 523264
  %v33 = vsel %vm31, %v17, 0
  %v36 = vsel %vm31, %v18, 0
  %v39 = vsel %vm31, %v19, 0
  %v42 = vsel %vm31, %v20, 0
  %v45 = vsel %vm31, %v21, 0
  %v48 = vsel %vm31, %v22, 0
  %50 = vmatprep.subr.mxu0 0.0
  %51 = vmatpush1.msra.mxu0 %v23
  %52 = vmatprep.subr.mxu0 0.0
  %53 = vmatpush1.msra.mxu0 %v24
  %54 = vmatprep.subr.mxu0 0.0
  %55 = vmatpush1.msra.mxu0 %v25
  %56 = vmatprep.subr.mxu0 0.0
  %57 = vmatpush1.msra.mxu0 %v26
  %58 = vmatprep.subr.mxu0 0.0
  %59 = vmatpush1.msra.mxu0 %v27
  %60 = vmatprep.subr.mxu0 0.0
  %61 = vmatpush1.msra.mxu0 %v28
  %62 = vmatprep.subr.mxu0 0.0
  %63 = vmatpush1.msra.mxu0 %v29
  %64 = vmatprep.subr.mxu0 0.0
  %65 = vmatpush1.msra.mxu0 %v30
  %66 = vmatprep.subr.mxu0 0.0
  %67 = vmatpush1.msra.mxu0 0.0
  %68 = vmatprep.subr.mxu0 0.0
  %69 = vmatpush1.msra.mxu0 0.0
  %70 = vmatprep.subr.mxu0 0.0
  %71 = vmatpush1.msra.mxu0 0.0
  %72 = vmatprep.subr.mxu0 0.0
  %73 = vmatpush1.msra.mxu0 0.0
  %74 = vmatprep.subr.mxu0 0.0
  %75 = vmatpush1.msra.mxu0 0.0
  %76 = vmatprep.subr.mxu0 0.0
  %77 = vmatpush1.msra.mxu0 0.0
  %78 = vmatprep.subr.mxu0 0.0
  %79 = vmatpush1.msra.mxu0 0.0
  %80 = vmatprep.subr.mxu0 0.0
  %81 = vmatpush1.msra.mxu0 0.0
  %82 = vmatprep.subr.mxu0 0.0
  %83 = vmatpush1.msra.mxu0 0.0
  %84 = vmatprep.subr.mxu0 0.0
  %85 = vmatpush1.msra.mxu0 0.0
  %86 = vmatprep.subr.mxu0 0.0
  %87 = vmatpush1.msra.mxu0 0.0
  %88 = vmatprep.subr.mxu0 0.0
  %89 = vmatpush1.msra.mxu0 0.0
  %90 = vmatprep.subr.mxu0 0.0
  %91 = vmatpush1.msra.mxu0 0.0
  %92 = vmatprep.subr.mxu0 0.0
  %93 = vmatpush1.msra.mxu0 0.0
  %94 = vmatprep.subr.mxu0 0.0
  %95 = vmatpush1.msra.mxu0 0.0
  %96 = vmatprep.subr.mxu0 0.0
  %97 = vmatpush1.msra.mxu0 0.0
  %98 = vmatprep.subr.mxu0 0.0
  %99 = vmatpush1.msra.mxu0 0.0
  %100 = vmatprep.subr.mxu0 0.0
  %101 = vmatpush1.msra.mxu0 0.0
  %102 = vmatprep.subr.mxu0 0.0
  %103 = vmatpush1.msra.mxu0 0.0
  %104 = vmatprep.subr.mxu0 0.0
  %105 = vmatpush1.msra.mxu0 0.0
  %106 = vmatprep.subr.mxu0 0.0
  %107 = vmatpush1.msra.mxu0 0.0
  %108 = vmatprep.subr.mxu0 0.0
  %109 = vmatpush1.msra.mxu0 0.0
  %110 = vmatprep.subr.mxu0 0.0
  %111 = vmatpush1.msra.mxu0 0.0
  %112 = vmatprep.subr.mxu0 0.0
  %113 = vmatpush1.msra.mxu0 0.0
  %114 = vmatprep.mubr.f32.mxu0 0.0
  %115 = vmatmul.mubr.f32.gmra.mrb[0].mxu0 %v33
  %v116 = vpop.f32.mrb[0].mxu0
  %v117 = vadd.f32 0.0, %v116
  %v118 = vpop.f32.mrb[0].mxu0
  %119 = vmatprep.mubr.f32.mxu0 0.0
  %120 = vmatmul.mubr.f32.gmra.mrb[0].mxu0 %v36
  %v121 = vpop.f32.mrb[0].mxu0
  %v122 = vadd.f32 0.0, %v121
  %v123 = vpop.f32.mrb[0].mxu0
  %124 = vmatprep.mubr.f32.mxu0 0.0
  %125 = vmatmul.mubr.f32.gmra.mrb[0].mxu0 %v39
  %v126 = vpop.f32.mrb[0].mxu0
  %v127 = vadd.f32 0.0, %v126
  %v128 = vpop.f32.mrb[0].mxu0
  %129 = vmatprep.mubr.f32.mxu0 0.0
  %130 = vmatmul.mubr.f32.gmra.mrb[0].mxu0 %v42
  %v131 = vpop.f32.mrb[0].mxu0
  %v132 = vadd.f32 0.0, %v131
  %v133 = vpop.f32.mrb[0].mxu0
  %134 = vmatprep.mubr.f32.mxu0 0.0
  %135 = vmatmul.mubr.f32.gmra.mrb[0].mxu0 %v45
  %v136 = vpop.f32.mrb[0].mxu0
  %v137 = vadd.f32 0.0, %v136
  %v138 = vpop.f32.mrb[0].mxu0
  %139 = vmatprep.mubr.f32.mxu0 0.0
  %140 = vmatmul.mubr.f32.gmra.mrb[0].mxu0 %v48
  %v141 = vpop.f32.mrb[0].mxu0
  %v142 = vadd.f32 0.0, %v141
  %v143 = vpop.f32.mrb[0].mxu0
  %144 = vdwg.mxu0
  %s145 = scalar_lea.vmem %s1, 64
  %v146 = vld [vmem:[%s145] sm:$0xff]
  %v147 = vld [vmem:[%s145 + $0x8] sm:$0xff]
  %v148 = vld [vmem:[%s145 + $0x10] sm:$0xff]
  %v149 = vld [vmem:[%s145 + $0x18] sm:$0xff]
  %v150 = vld [vmem:[%s145 + $0x20] sm:$0xff]
  %v151 = vld [vmem:[%s145 + $0x28] sm:$0xff]
  %v152 = vld [vmem:[%s145 + $0x30] sm:$0xff]
  %v153 = vld [vmem:[%s145 + $0x38] sm:$0xff]
  %154 = vmatprep.subr.mxu0 0.0
  %155 = vmatpush1.msra.mxu0 %v146
  %156 = vmatprep.subr.mxu0 0.0
  %157 = vmatpush1.msra.mxu0 %v147
  %158 = vmatprep.subr.mxu0 0.0
  %159 = vmatpush1.msra.mxu0 %v148
  %160 = vmatprep.subr.mxu0 0.0
  %161 = vmatpush1.msra.mxu0 %v149
  %162 = vmatprep.subr.mxu0 0.0
  %163 = vmatpush1.msra.mxu0 %v150
  %164 = vmatprep.subr.mxu0 0.0
  %165 = vmatpush1.msra.mxu0 %v151
  %166 = vmatprep.subr.mxu0 0.0
  %167 = vmatpush1.msra.mxu0 %v152
  %168 = vmatprep.subr.mxu0 0.0
  %169 = vmatpush1.msra.mxu0 %v153
  %170 = vmatprep.subr.mxu0 0.0
  %171 = vmatpush1.msra.mxu0 0.0
  %172 = vmatprep.subr.mxu0 0.0
  %173 = vmatpush1.msra.mxu0 0.0
  %174 = vmatprep.subr.mxu0 0.0
  %175 = vmatpush1.msra.mxu0 0.0
  %176 = vmatprep.subr.mxu0 0.0
  %177 = vmatpush1.msra.mxu0 0.0
  %178 = vmatprep.subr.mxu0 0.0
  %179 = vmatpush1.msra.mxu0 0.0
  %180 = vmatprep.subr.mxu0 0.0
  %181 = vmatpush1.msra.mxu0 0.0
  %182 = vmatprep.subr.mxu0 0.0
  %183 = vmatpush1.msra.mxu0 0.0
  %184 = vmatprep.subr.mxu0 0.0
  %185 = vmatpush1.msra.mxu0 0.0
  %186 = vmatprep.subr.mxu0 0.0
  %187 = vmatpush1.msra.mxu0 0.0
  %188 = vmatprep.subr.mxu0 0.0
  %189 = vmatpush1.msra.mxu0 0.0
  %190 = vmatprep.subr.mxu0 0.0
  %191 = vmatpush1.msra.mxu0 0.0
  %192 = vmatprep.subr.mxu0 0.0
  %193 = vmatpush1.msra.mxu0 0.0
  %194 = vmatprep.subr.mxu0 0.0
  %195 = vmatpush1.msra.mxu0 0.0
  %196 = vmatprep.subr.mxu0 0.0
  %197 = vmatpush1.msra.mxu0 0.0
  %198 = vmatprep.subr.mxu0 0.0
  %199 = vmatpush1.msra.mxu0 0.0
  %200 = vmatprep.subr.mxu0 0.0
  %201 = vmatpush1.msra.mxu0 0.0
  %202 = vmatprep.subr.mxu0 0.0
  %203 = vmatpush1.msra.mxu0 0.0
  %204 = vmatprep.subr.mxu0 0.0
  %205 = vmatpush1.msra.mxu0 0.0
  %206 = vmatprep.subr.mxu0 0.0
  %207 = vmatpush1.msra.mxu0 0.0
  %208 = vmatprep.subr.mxu0 0.0
  %209 = vmatpush1.msra.mxu0 0.0
  %210 = vmatprep.subr.mxu0 0.0
  %211 = vmatpush1.msra.mxu0 0.0
  %212 = vmatprep.subr.mxu0 0.0
  %213 = vmatpush1.msra.mxu0 0.0
  %214 = vmatprep.subr.mxu0 0.0
  %215 = vmatpush1.msra.mxu0 0.0
  %216 = vmatprep.subr.mxu0 0.0
  %217 = vmatpush1.msra.mxu0 0.0
  %218 = vmatprep.mubr.f32.mxu0 0.0
  %219 = vmatmul.mubr.f32.gmra.mrb[0].mxu0 %v33
  %v220 = vpop.f32.mrb[0].mxu0
  %v221 = vadd.f32 0.0, %v220
  %v222 = vpop.f32.mrb[0].mxu0
  %223 = vmatprep.mubr.f32.mxu0 0.0
  %224 = vmatmul.mubr.f32.gmra.mrb[0].mxu0 %v36
  %v225 = vpop.f32.mrb[0].mxu0
  %v226 = vadd.f32 0.0, %v225
  %v227 = vpop.f32.mrb[0].mxu0
  %228 = vmatprep.mubr.f32.mxu0 0.0
  %229 = vmatmul.mubr.f32.gmra.mrb[0].mxu0 %v39
  %v230 = vpop.f32.mrb[0].mxu0
  %v231 = vadd.f32 0.0, %v230
  %v232 = vpop.f32.mrb[0].mxu0
  %233 = vmatprep.mubr.f32.mxu0 0.0
  %234 = vmatmul.mubr.f32.gmra.mrb[0].mxu0 %v42
  %v235 = vpop.f32.mrb[0].mxu0
  %v236 = vadd.f32 0.0, %v235
  %v237 = vpop.f32.mrb[0].mxu0
  %238 = vmatprep.mubr.f32.mxu0 0.0
  %239 = vmatmul.mubr.f32.gmra.mrb[0].mxu0 %v45
  %v240 = vpop.f32.mrb[0].mxu0
  %v241 = vadd.f32 0.0, %v240
  %v242 = vpop.f32.mrb[0].mxu0
  %243 = vmatprep.mubr.f32.mxu0 0.0
  %244 = vmatmul.mubr.f32.gmra.mrb[0].mxu0 %v48
  %v245 = vpop.f32.mrb[0].mxu0
  %v246 = vadd.f32 0.0, %v245
  %v247 = vpop.f32.mrb[0].mxu0
  %248 = vdwg.mxu0
  %s249 = scalar_lea.vmem %s1, 128
  %v250 = vld [vmem:[%s249] sm:$0xff]
  %v251 = vld [vmem:[%s249 + $0x8] sm:$0xff]
  %v252 = vld [vmem:[%s249 + $0x10] sm:$0xff]
  %v253 = vld [vmem:[%s249 + $0x18] sm:$0xff]
  %v254 = vld [vmem:[%s249 + $0x20] sm:$0xff]
  %v255 = vld [vmem:[%s249 + $0x28] sm:$0xff]
  %v256 = vld [vmem:[%s249 + $0x30] sm:$0xff]
  %v257 = vld [vmem:[%s249 + $0x38] sm:$0xff]
  %258 = vmatprep.subr.mxu0 0.0
  %259 = vmatpush1.msra.mxu0 %v250
  %260 = vmatprep.subr.mxu0 0.0
  %261 = vmatpush1.msra.mxu0 %v251
  %262 = vmatprep.subr.mxu0 0.0
  %263 = vmatpush1.msra.mxu0 %v252
  %264 = vmatprep.subr.mxu0 0.0
  %265 = vmatpush1.msra.mxu0 %v253
  %266 = vmatprep.subr.mxu0 0.0
  %267 = vmatpush1.msra.mxu0 %v254
  %268 = vmatprep.subr.mxu0 0.0
  %269 = vmatpush1.msra.mxu0 %v255
  %270 = vmatprep.subr.mxu0 0.0
  %271 = vmatpush1.msra.mxu0 %v256
  %272 = vmatprep.subr.mxu0 0.0
  %273 = vmatpush1.msra.mxu0 %v257
  %274 = vmatprep.subr.mxu0 0.0
  %275 = vmatpush1.msra.mxu0 0.0
  %276 = vmatprep.subr.mxu0 0.0
  %277 = vmatpush1.msra.mxu0 0.0
  %278 = vmatprep.subr.mxu0 0.0
  %279 = vmatpush1.msra.mxu0 0.0
  %280 = vmatprep.subr.mxu0 0.0
  %281 = vmatpush1.msra.mxu0 0.0
  %282 = vmatprep.subr.mxu0 0.0
  %283 = vmatpush1.msra.mxu0 0.0
  %284 = vmatprep.subr.mxu0 0.0
  %285 = vmatpush1.msra.mxu0 0.0
  %286 = vmatprep.subr.mxu0 0.0
  %287 = vmatpush1.msra.mxu0 0.0
  %288 = vmatprep.subr.mxu0 0.0
  %289 = vmatpush1.msra.mxu0 0.0
  %290 = vmatprep.subr.mxu0 0.0
  %291 = vmatpush1.msra.mxu0 0.0
  %292 = vmatprep.subr.mxu0 0.0
  %293 = vmatpush1.msra.mxu0 0.0
  %294 = vmatprep.subr.mxu0 0.0
  %295 = vmatpush1.msra.mxu0 0.0
  %296 = vmatprep.subr.mxu0 0.0
  %297 = vmatpush1.msra.mxu0 0.0
  %298 = vmatprep.subr.mxu0 0.0
  %299 = vmatpush1.msra.mxu0 0.0
  %300 = vmatprep.subr.mxu0 0.0
  %301 = vmatpush1.msra.mxu0 0.0
  %302 = vmatprep.subr.mxu0 0.0
  %303 = vmatpush1.msra.mxu0 0.0
  %304 = vmatprep.subr.mxu0 0.0
  %305 = vmatpush1.msra.mxu0 0.0
  %306 = vmatprep.subr.mxu0 0.0
  %307 = vmatpush1.msra.mxu0 0.0
  %308 = vmatprep.subr.mxu0 0.0
  %309 = vmatpush1.msra.mxu0 0.0
  %310 = vmatprep.subr.mxu0 0.0
  %311 = vmatpush1.msra.mxu0 0.0
  %312 = vmatprep.subr.mxu0 0.0
  %313 = vmatpush1.msra.mxu0 0.0
  %314 = vmatprep.subr.mxu0 0.0
  %315 = vmatpush1.msra.mxu0 0.0
  %316 = vmatprep.subr.mxu0 0.0
  %317 = vmatpush1.msra.mxu0 0.0
  %318 = vmatprep.subr.mxu0 0.0
  %319 = vmatpush1.msra.mxu0 0.0
  %320 = vmatprep.subr.mxu0 0.0
  %321 = vmatpush1.msra.mxu0 0.0
  %322 = vmatprep.mubr.f32.mxu0 0.0
  %323 = vmatmul.mubr.f32.gmra.mrb[0].mxu0 %v33
  %v324 = vpop.f32.mrb[0].mxu0
  %v325 = vadd.f32 0.0, %v324
  %v326 = vpop.f32.mrb[0].mxu0
  %327 = vmatprep.mubr.f32.mxu0 0.0
  %328 = vmatmul.mubr.f32.gmra.mrb[0].mxu0 %v36
  %v329 = vpop.f32.mrb[0].mxu0
  %v330 = vadd.f32 0.0, %v329
  %v331 = vpop.f32.mrb[0].mxu0
  %332 = vmatprep.mubr.f32.mxu0 0.0
  %333 = vmatmul.mubr.f32.gmra.mrb[0].mxu0 %v39
  %v334 = vpop.f32.mrb[0].mxu0
  %v335 = vadd.f32 0.0, %v334
  %v336 = vpop.f32.mrb[0].mxu0
  %337 = vmatprep.mubr.f32.mxu0 0.0
  %338 = vmatmul.mubr.f32.gmra.mrb[0].mxu0 %v42
  %v339 = vpop.f32.mrb[0].mxu0
  %v340 = vadd.f32 0.0, %v339
  %v341 = vpop.f32.mrb[0].mxu0
  %342 = vmatprep.mubr.f32.mxu0 0.0
  %343 = vmatmul.mubr.f32.gmra.mrb[0].mxu0 %v45
  %v344 = vpop.f32.mrb[0].mxu0
  %v345 = vadd.f32 0.0, %v344
  %v346 = vpop.f32.mrb[0].mxu0
  %347 = vmatprep.mubr.f32.mxu0 0.0
  %348 = vmatmul.mubr.f32.gmra.mrb[0].mxu0 %v48
  %v349 = vpop.f32.mrb[0].mxu0
  %v350 = vadd.f32 0.0, %v349
  %v351 = vpop.f32.mrb[0].mxu0
  %352 = vdwg.mxu0
  %vm359 = vcmask 1046528
  %v360 = vrot.slane %v221, 1
  %v361 = vrot.slane %v226, 1
  %v362 = vsel %vm359, %v360, %v361
  %v363 = vrot.slane %v231, 1
  %v364 = vsel %vm359, %v361, %v363
  %v365 = vrot.slane %v236, 1
  %v366 = vsel %vm359, %v363, %v365
  %v367 = vrot.slane %v241, 1
  %v368 = vsel %vm359, %v365, %v367
  %v369 = vrot.slane %v246, 1
  %v370 = vsel %vm359, %v367, %v369
  %v377 = vadd.f32 %v117, %v362
  %v378 = vadd.f32 %v122, %v364
  %v379 = vadd.f32 %v127, %v366
  %v380 = vadd.f32 %v132, %v368
  %v381 = vadd.f32 %v137, %v370
  %v382 = vadd.f32 %v142, %v369
  %vm389 = vcmask 1045504
  %v390 = vrot.slane %v325, 2
  %v391 = vrot.slane %v330, 2
  %v392 = vsel %vm389, %v390, %v391
  %v393 = vrot.slane %v335, 2
  %v394 = vsel %vm389, %v391, %v393
  %v395 = vrot.slane %v340, 2
  %v396 = vsel %vm389, %v393, %v395
  %v397 = vrot.slane %v345, 2
  %v398 = vsel %vm389, %v395, %v397
  %v399 = vrot.slane %v350, 2
  %v400 = vsel %vm389, %v397, %v399
  %v407 = vadd.f32 %v377, %v392
  %v408 = vadd.f32 %v378, %v394
  %v409 = vadd.f32 %v379, %v396
  %v410 = vadd.f32 %v380, %v398
  %v411 = vadd.f32 %v381, %v400
  %v412 = vadd.f32 %v382, %v399
  %v413 = vmax.f32 %v407, 0.0
  %v414 = vmax.f32 %v408, 0.0
  %v415 = vmax.f32 %v409, 0.0
  %v416 = vmax.f32 %v410, 0.0
  %v417 = vmax.f32 %v411, 0.0
  %v418 = vmax.f32 %v412, 0.0
  %v419 = vld [vmem:[%s3] sm:$0xff]
  %v420 = vld [vmem:[%s3 + $0x8] sm:$0xff]
  %v421 = vld [vmem:[%s3 + $0x10] sm:$0xff]
  %v422 = vld [vmem:[%s3 + $0x18] sm:$0xff]
  %v423 = vld [vmem:[%s3 + $0x20] sm:$0xff]
  %v424 = vld [vmem:[%s3 + $0x28] sm:$0x3f]
  %v425 = vmul.f32 %v413, %v419
  %v426 = vmul.f32 %v414, %v420
  %v427 = vmul.f32 %v415, %v421
  %v428 = vmul.f32 %v416, %v422
  %v429 = vmul.f32 %v417, %v423
  %v430 = vmul.f32 %v418, %v424
  %431 = vst [vmem:[#allocation2] sm:$0x1] 0.0
  %432 = vst [vmem:[#allocation2 + $0x2f] sm:$0x1] 0.0
  %433 = vst [vmem:[#allocation2 + $0x1] sm:$0xff] %v425
  %434 = vst [vmem:[#allocation2 + $0x9] sm:$0xff] %v426
  %435 = vst [vmem:[#allocation2 + $0x11] sm:$0xff] %v427
  %436 = vst [vmem:[#allocation2 + $0x19] sm:$0xff] %v428
  %437 = vst [vmem:[#allocation2 + $0x21] sm:$0xff] %v429
  %438 = vst [vmem:[#allocation2 + $0x29] sm:$0x3f] %v430
  %v439 = vld [vmem:[#allocation2] sm:$0xff]
  %v440 = vld [vmem:[#allocation2 + $0x8] sm:$0xff]
  %v441 = vld [vmem:[#allocation2 + $0x10] sm:$0xff]
  %v442 = vld [vmem:[#allocation2 + $0x18] sm:$0xff]
  %v443 = vld [vmem:[#allocation2 + $0x20] sm:$0xff]
  %v444 = vld [vmem:[#allocation2 + $0x28] sm:$0xff]
  %v445 = vld [vmem:[%s2] sm:$0xff]
  %v446 = vld [vmem:[%s2 + $0x8] sm:$0xff]
  %v447 = vld [vmem:[%s2 + $0x10] sm:$0xff]
  %v448 = vld [vmem:[%s2 + $0x18] sm:$0xff]
  %v449 = vld [vmem:[%s2 + $0x20] sm:$0xff]
  %v450 = vld [vmem:[%s2 + $0x28] sm:$0xff]
  %v451 = vld [vmem:[%s2 + $0x30] sm:$0xff]
  %v452 = vld [vmem:[%s2 + $0x38] sm:$0xff]
  %v453 = vld [vmem:[%s2 + $0x40] sm:$0xff]
  %v454 = vld [vmem:[%s2 + $0x48] sm:$0xff]
  %v455 = vld [vmem:[%s2 + $0x50] sm:$0xff]
  %v456 = vld [vmem:[%s2 + $0x58] sm:$0xff]
  %v457 = vld [vmem:[%s2 + $0x60] sm:$0xff]
  %v458 = vld [vmem:[%s2 + $0x68] sm:$0xff]
  %v459 = vld [vmem:[%s2 + $0x70] sm:$0xff]
  %v460 = vld [vmem:[%s2 + $0x78] sm:$0xff]
  %461 = vmatprep.subr.mxu0 0.0
  %462 = vmatpush1.msra.mxu0 %v445
  %463 = vmatprep.subr.mxu0 0.0
  %464 = vmatpush1.msra.mxu0 %v446
  %465 = vmatprep.subr.mxu0 0.0
  %466 = vmatpush1.msra.mxu0 %v447
  %467 = vmatprep.subr.mxu0 0.0
  %468 = vmatpush1.msra.mxu0 %v448
  %469 = vmatprep.subr.mxu0 0.0
  %470 = vmatpush1.msra.mxu0 %v449
  %471 = vmatprep.subr.mxu0 0.0
  %472 = vmatpush1.msra.mxu0 %v450
  %473 = vmatprep.subr.mxu0 0.0
  %474 = vmatpush1.msra.mxu0 %v451
  %475 = vmatprep.subr.mxu0 0.0
  %476 = vmatpush1.msra.mxu0 %v452
  %477 = vmatprep.subr.mxu0 0.0
  %478 = vmatpush1.msra.mxu0 %v453
  %479 = vmatprep.subr.mxu0 0.0
  %480 = vmatpush1.msra.mxu0 %v454
  %481 = vmatprep.subr.mxu0 0.0
  %482 = vmatpush1.msra.mxu0 %v455
  %483 = vmatprep.subr.mxu0 0.0
  %484 = vmatpush1.msra.mxu0 %v456
  %485 = vmatprep.subr.mxu0 0.0
  %486 = vmatpush1.msra.mxu0 %v457
  %487 = vmatprep.subr.mxu0 0.0
  %488 = vmatpush1.msra.mxu0 %v458
  %489 = vmatprep.subr.mxu0 0.0
  %490 = vmatpush1.msra.mxu0 %v459
  %491 = vmatprep.subr.mxu0 0.0
  %492 = vmatpush1.msra.mxu0 %v460
  %493 = vmatprep.subr.mxu0 0.0
  %494 = vmatpush1.msra.mxu0 0.0
  %495 = vmatprep.subr.mxu0 0.0
  %496 = vmatpush1.msra.mxu0 0.0
  %497 = vmatprep.subr.mxu0 0.0
  %498 = vmatpush1.msra.mxu0 0.0
  %499 = vmatprep.subr.mxu0 0.0
  %500 = vmatpush1.msra.mxu0 0.0
  %501 = vmatprep.subr.mxu0 0.0
  %502 = vmatpush1.msra.mxu0 0.0
  %503 = vmatprep.subr.mxu0 0.0
  %504 = vmatpush1.msra.mxu0 0.0
  %505 = vmatprep.subr.mxu0 0.0
  %506 = vmatpush1.msra.mxu0 0.0
  %507 = vmatprep.subr.mxu0 0.0
  %508 = vmatpush1.msra.mxu0 0.0
  %509 = vmatprep.subr.mxu0 0.0
  %510 = vmatpush1.msra.mxu0 0.0
  %511 = vmatprep.subr.mxu0 0.0
  %512 = vmatpush1.msra.mxu0 0.0
  %513 = vmatprep.subr.mxu0 0.0
  %514 = vmatpush1.msra.mxu0 0.0
  %515 = vmatprep.subr.mxu0 0.0
  %516 = vmatpush1.msra.mxu0 0.0
  %517 = vmatprep.subr.mxu0 0.0
  %518 = vmatpush1.msra.mxu0 0.0
  %519 = vmatprep.subr.mxu0 0.0
  %520 = vmatpush1.msra.mxu0 0.0
  %521 = vmatprep.subr.mxu0 0.0
  %522 = vmatpush1.msra.mxu0 0.0
  %523 = vmatprep.subr.mxu0 0.0
  %524 = vmatpush1.msra.mxu0 0.0
  %525 = vmatprep.mubr.f32.mxu0 0.0
  %526 = vmatmul.mubr.f32.gmra.mrb[0].mxu0 %v439
  %v527 = vpop.f32.mrb[0].mxu0
  %v528 = vadd.f32 0.0, %v527
  %v529 = vpop.f32.mrb[0].mxu0
  %530 = vmatprep.mubr.f32.mxu0 0.0
  %531 = vmatmul.mubr.f32.gmra.mrb[0].mxu0 %v440
  %v532 = vpop.f32.mrb[0].mxu0
  %v533 = vadd.f32 0.0, %v532
  %v534 = vpop.f32.mrb[0].mxu0
  %535 = vmatprep.mubr.f32.mxu0 0.0
  %536 = vmatmul.mubr.f32.gmra.mrb[0].mxu0 %v441
  %v537 = vpop.f32.mrb[0].mxu0
  %v538 = vpop.f32.mrb[0].mxu0
  %539 = vmatprep.mubr.f32.mxu0 0.0
  %540 = vmatmul.mubr.f32.gmra.mrb[0].mxu0 %v442
  %v541 = vpop.f32.mrb[0].mxu0
  %v542 = vadd.f32 0.0, %v541
  %v543 = vpop.f32.mrb[0].mxu0
  %544 = vmatprep.mubr.f32.mxu0 0.0
  %545 = vmatmul.mubr.f32.gmra.mrb[0].mxu0 %v443
  %v546 = vpop.f32.mrb[0].mxu0
  %v547 = vadd.f32 0.0, %v546
  %v548 = vpop.f32.mrb[0].mxu0
  %549 = vmatprep.mubr.f32.mxu0 0.0
  %550 = vmatmul.mubr.f32.gmra.mrb[0].mxu0 %v444
  %v551 = vpop.f32.mrb[0].mxu0
  %v552 = vpop.f32.mrb[0].mxu0
  %553 = vdwg.mxu0
  %s554 = scalar_lea.vmem %s2, 128
  %v555 = vld [vmem:[%s554] sm:$0xff]
  %v556 = vld [vmem:[%s554 + $0x8] sm:$0xff]
  %v557 = vld [vmem:[%s554 + $0x10] sm:$0xff]
  %v558 = vld [vmem:[%s554 + $0x18] sm:$0xff]
  %v559 = vld [vmem:[%s554 + $0x20] sm:$0xff]
  %v560 = vld [vmem:[%s554 + $0x28] sm:$0xff]
  %v561 = vld [vmem:[%s554 + $0x30] sm:$0xff]
  %v562 = vld [vmem:[%s554 + $0x38] sm:$0xff]
  %v563 = vld [vmem:[%s554 + $0x40] sm:$0xff]
  %v564 = vld [vmem:[%s554 + $0x48] sm:$0xff]
  %v565 = vld [vmem:[%s554 + $0x50] sm:$0xff]
  %v566 = vld [vmem:[%s554 + $0x58] sm:$0xff]
  %v567 = vld [vmem:[%s554 + $0x60] sm:$0xff]
  %v568 = vld [vmem:[%s554 + $0x68] sm:$0xff]
  %v569 = vld [vmem:[%s554 + $0x70] sm:$0xff]
  %v570 = vld [vmem:[%s554 + $0x78] sm:$0xff]
  %571 = vmatprep.subr.mxu0 0.0
  %572 = vmatpush1.msra.mxu0 %v555
  %573 = vmatprep.subr.mxu0 0.0
  %574 = vmatpush1.msra.mxu0 %v556
  %575 = vmatprep.subr.mxu0 0.0
  %576 = vmatpush1.msra.mxu0 %v557
  %577 = vmatprep.subr.mxu0 0.0
  %578 = vmatpush1.msra.mxu0 %v558
  %579 = vmatprep.subr.mxu0 0.0
  %580 = vmatpush1.msra.mxu0 %v559
  %581 = vmatprep.subr.mxu0 0.0
  %582 = vmatpush1.msra.mxu0 %v560
  %583 = vmatprep.subr.mxu0 0.0
  %584 = vmatpush1.msra.mxu0 %v561
  %585 = vmatprep.subr.mxu0 0.0
  %586 = vmatpush1.msra.mxu0 %v562
  %587 = vmatprep.subr.mxu0 0.0
  %588 = vmatpush1.msra.mxu0 %v563
  %589 = vmatprep.subr.mxu0 0.0
  %590 = vmatpush1.msra.mxu0 %v564
  %591 = vmatprep.subr.mxu0 0.0
  %592 = vmatpush1.msra.mxu0 %v565
  %593 = vmatprep.subr.mxu0 0.0
  %594 = vmatpush1.msra.mxu0 %v566
  %595 = vmatprep.subr.mxu0 0.0
  %596 = vmatpush1.msra.mxu0 %v567
  %597 = vmatprep.subr.mxu0 0.0
  %598 = vmatpush1.msra.mxu0 %v568
  %599 = vmatprep.subr.mxu0 0.0
  %600 = vmatpush1.msra.mxu0 %v569
  %601 = vmatprep.subr.mxu0 0.0
  %602 = vmatpush1.msra.mxu0 %v570
  %603 = vmatprep.subr.mxu0 0.0
  %604 = vmatpush1.msra.mxu0 0.0
  %605 = vmatprep.subr.mxu0 0.0
  %606 = vmatpush1.msra.mxu0 0.0
  %607 = vmatprep.subr.mxu0 0.0
  %608 = vmatpush1.msra.mxu0 0.0
  %609 = vmatprep.subr.mxu0 0.0
  %610 = vmatpush1.msra.mxu0 0.0
  %611 = vmatprep.subr.mxu0 0.0
  %612 = vmatpush1.msra.mxu0 0.0
  %613 = vmatprep.subr.mxu0 0.0
  %614 = vmatpush1.msra.mxu0 0.0
  %615 = vmatprep.subr.mxu0 0.0
  %616 = vmatpush1.msra.mxu0 0.0
  %617 = vmatprep.subr.mxu0 0.0
  %618 = vmatpush1.msra.mxu0 0.0
  %619 = vmatprep.subr.mxu0 0.0
  %620 = vmatpush1.msra.mxu0 0.0
  %621 = vmatprep.subr.mxu0 0.0
  %622 = vmatpush1.msra.mxu0 0.0
  %623 = vmatprep.subr.mxu0 0.0
  %624 = vmatpush1.msra.mxu0 0.0
  %625 = vmatprep.subr.mxu0 0.0
  %626 = vmatpush1.msra.mxu0 0.0
  %627 = vmatprep.subr.mxu0 0.0
  %628 = vmatpush1.msra.mxu0 0.0
  %629 = vmatprep.subr.mxu0 0.0
  %630 = vmatpush1.msra.mxu0 0.0
  %631 = vmatprep.subr.mxu0 0.0
  %632 = vmatpush1.msra.mxu0 0.0
  %633 = vmatprep.subr.mxu0 0.0
  %634 = vmatpush1.msra.mxu0 0.0
  %635 = vmatprep.mubr.f32.mxu0 0.0
  %636 = vmatmul.mubr.f32.gmra.mrb[0].mxu0 %v439
  %v637 = vpop.f32.mrb[0].mxu0
  %v638 = vadd.f32 0.0, %v637
  %v639 = vpop.f32.mrb[0].mxu0
  %640 = vmatprep.mubr.f32.mxu0 0.0
  %641 = vmatmul.mubr.f32.gmra.mrb[0].mxu0 %v440
  %v642 = vpop.f32.mrb[0].mxu0
  %v643 = vadd.f32 0.0, %v642
  %v644 = vpop.f32.mrb[0].mxu0
  %645 = vmatprep.mubr.f32.mxu0 0.0
  %646 = vmatmul.mubr.f32.gmra.mrb[0].mxu0 %v441
  %v647 = vpop.f32.mrb[0].mxu0
  %v648 = vadd.f32 0.0, %v647
  %v649 = vpop.f32.mrb[0].mxu0
  %650 = vmatprep.mubr.f32.mxu0 0.0
  %651 = vmatmul.mubr.f32.gmra.mrb[0].mxu0 %v442
  %v652 = vpop.f32.mrb[0].mxu0
  %v653 = vadd.f32 0.0, %v652
  %v654 = vpop.f32.mrb[0].mxu0
  %655 = vmatprep.mubr.f32.mxu0 0.0
  %656 = vmatmul.mubr.f32.gmra.mrb[0].mxu0 %v443
  %v657 = vpop.f32.mrb[0].mxu0
  %v658 = vadd.f32 0.0, %v657
  %v659 = vpop.f32.mrb[0].mxu0
  %660 = vmatprep.mubr.f32.mxu0 0.0
  %661 = vmatmul.mubr.f32.gmra.mrb[0].mxu0 %v444
  %v662 = vpop.f32.mrb[0].mxu0
  %v663 = vadd.f32 0.0, %v662
  %v664 = vpop.f32.mrb[0].mxu0
  %665 = vdwg.mxu0
  %s666 = scalar_lea.vmem %s2, 256
  %v667 = vld [vmem:[%s666] sm:$0xff]
  %v668 = vld [vmem:[%s666 + $0x8] sm:$0xff]
  %v669 = vld [vmem:[%s666 + $0x10] sm:$0xff]
  %v670 = vld [vmem:[%s666 + $0x18] sm:$0xff]
  %v671 = vld [vmem:[%s666 + $0x20] sm:$0xff]
  %v672 = vld [vmem:[%s666 + $0x28] sm:$0xff]
  %v673 = vld [vmem:[%s666 + $0x30] sm:$0xff]
  %v674 = vld [vmem:[%s666 + $0x38] sm:$0xff]
  %v675 = vld [vmem:[%s666 + $0x40] sm:$0xff]
  %v676 = vld [vmem:[%s666 + $0x48] sm:$0xff]
  %v677 = vld [vmem:[%s666 + $0x50] sm:$0xff]
  %v678 = vld [vmem:[%s666 + $0x58] sm:$0xff]
  %v679 = vld [vmem:[%s666 + $0x60] sm:$0xff]
  %v680 = vld [vmem:[%s666 + $0x68] sm:$0xff]
  %v681 = vld [vmem:[%s666 + $0x70] sm:$0xff]
  %v682 = vld [vmem:[%s666 + $0x78] sm:$0xff]
  %683 = vmatprep.subr.mxu0 0.0
  %684 = vmatpush1.msra.mxu0 %v667
  %685 = vmatprep.subr.mxu0 0.0
  %686 = vmatpush1.msra.mxu0 %v668
  %687 = vmatprep.subr.mxu0 0.0
  %688 = vmatpush1.msra.mxu0 %v669
  %689 = vmatprep.subr.mxu0 0.0
  %690 = vmatpush1.msra.mxu0 %v670
  %691 = vmatprep.subr.mxu0 0.0
  %692 = vmatpush1.msra.mxu0 %v671
  %693 = vmatprep.subr.mxu0 0.0
  %694 = vmatpush1.msra.mxu0 %v672
  %695 = vmatprep.subr.mxu0 0.0
  %696 = vmatpush1.msra.mxu0 %v673
  %697 = vmatprep.subr.mxu0 0.0
  %698 = vmatpush1.msra.mxu0 %v674
  %699 = vmatprep.subr.mxu0 0.0
  %700 = vmatpush1.msra.mxu0 %v675
  %701 = vmatprep.subr.mxu0 0.0
  %702 = vmatpush1.msra.mxu0 %v676
  %703 = vmatprep.subr.mxu0 0.0
  %704 = vmatpush1.msra.mxu0 %v677
  %705 = vmatprep.subr.mxu0 0.0
  %706 = vmatpush1.msra.mxu0 %v678
  %707 = vmatprep.subr.mxu0 0.0
  %708 = vmatpush1.msra.mxu0 %v679
  %709 = vmatprep.subr.mxu0 0.0
  %710 = vmatpush1.msra.mxu0 %v680
  %711 = vmatprep.subr.mxu0 0.0
  %712 = vmatpush1.msra.mxu0 %v681
  %713 = vmatprep.subr.mxu0 0.0
  %714 = vmatpush1.msra.mxu0 %v682
  %715 = vmatprep.subr.mxu0 0.0
  %716 = vmatpush1.msra.mxu0 0.0
  %717 = vmatprep.subr.mxu0 0.0
  %718 = vmatpush1.msra.mxu0 0.0
  %719 = vmatprep.subr.mxu0 0.0
  %720 = vmatpush1.msra.mxu0 0.0
  %721 = vmatprep.subr.mxu0 0.0
  %722 = vmatpush1.msra.mxu0 0.0
  %723 = vmatprep.subr.mxu0 0.0
  %724 = vmatpush1.msra.mxu0 0.0
  %725 = vmatprep.subr.mxu0 0.0
  %726 = vmatpush1.msra.mxu0 0.0
  %727 = vmatprep.subr.mxu0 0.0
  %728 = vmatpush1.msra.mxu0 0.0
  %729 = vmatprep.subr.mxu0 0.0
  %730 = vmatpush1.msra.mxu0 0.0
  %731 = vmatprep.subr.mxu0 0.0
  %732 = vmatpush1.msra.mxu0 0.0
  %733 = vmatprep.subr.mxu0 0.0
  %734 = vmatpush1.msra.mxu0 0.0
  %735 = vmatprep.subr.mxu0 0.0
  %736 = vmatpush1.msra.mxu0 0.0
  %737 = vmatprep.subr.mxu0 0.0
  %738 = vmatpush1.msra.mxu0 0.0
  %739 = vmatprep.subr.mxu0 0.0
  %740 = vmatpush1.msra.mxu0 0.0
  %741 = vmatprep.subr.mxu0 0.0
  %742 = vmatpush1.msra.mxu0 0.0
  %743 = vmatprep.subr.mxu0 0.0
  %744 = vmatpush1.msra.mxu0 0.0
  %745 = vmatprep.subr.mxu0 0.0
  %746 = vmatpush1.msra.mxu0 0.0
  %747 = vmatprep.mubr.f32.mxu0 0.0
  %748 = vmatmul.mubr.f32.gmra.mrb[0].mxu0 %v439
  %v749 = vpop.f32.mrb[0].mxu0
  %v750 = vadd.f32 0.0, %v749
  %v751 = vpop.f32.mrb[0].mxu0
  %752 = vmatprep.mubr.f32.mxu0 0.0
  %753 = vmatmul.mubr.f32.gmra.mrb[0].mxu0 %v440
  %v754 = vpop.f32.mrb[0].mxu0
  %v755 = vadd.f32 0.0, %v754
  %v756 = vpop.f32.mrb[0].mxu0
  %757 = vmatprep.mubr.f32.mxu0 0.0
  %758 = vmatmul.mubr.f32.gmra.mrb[0].mxu0 %v441
  %v759 = vpop.f32.mrb[0].mxu0
  %v760 = vadd.f32 0.0, %v759
  %v761 = vpop.f32.mrb[0].mxu0
  %762 = vmatprep.mubr.f32.mxu0 0.0
  %763 = vmatmul.mubr.f32.gmra.mrb[0].mxu0 %v442
  %v764 = vpop.f32.mrb[0].mxu0
  %v765 = vadd.f32 0.0, %v764
  %v766 = vpop.f32.mrb[0].mxu0
  %767 = vmatprep.mubr.f32.mxu0 0.0
  %768 = vmatmul.mubr.f32.gmra.mrb[0].mxu0 %v443
  %v769 = vpop.f32.mrb[0].mxu0
  %v770 = vadd.f32 0.0, %v769
  %v771 = vpop.f32.mrb[0].mxu0
  %772 = vmatprep.mubr.f32.mxu0 0.0
  %773 = vmatmul.mubr.f32.gmra.mrb[0].mxu0 %v444
  %v774 = vpop.f32.mrb[0].mxu0
  %v775 = vadd.f32 0.0, %v774
  %v776 = vpop.f32.mrb[0].mxu0
  %777 = vdwg.mxu0
  %v784 = vrot.slane %v638, 1
  %v785 = vrot.slane %v643, 1
  %v786 = vsel %vm359, %v784, %v785
  %v787 = vrot.slane %v648, 1
  %v788 = vsel %vm359, %v785, %v787
  %v789 = vrot.slane %v653, 1
  %v790 = vrot.slane %v658, 1
  %v791 = vsel %vm359, %v789, %v790
  %v792 = vrot.slane %v663, 1
  %v793 = vsel %vm359, %v790, %v792
  %v798 = vadd.f32 %v528, %v786
  %v799 = vadd.f32 %v533, %v788
  %v800 = vadd.f32 %v542, %v791
  %v801 = vadd.f32 %v547, %v793
  %v808 = vrot.slane %v750, 2
  %v809 = vrot.slane %v755, 2
  %v810 = vsel %vm389, %v808, %v809
  %v811 = vrot.slane %v760, 2
  %v812 = vsel %vm389, %v809, %v811
  %v813 = vrot.slane %v765, 2
  %v814 = vrot.slane %v770, 2
  %v815 = vsel %vm389, %v813, %v814
  %v816 = vrot.slane %v775, 2
  %v817 = vsel %vm389, %v814, %v816
  %v822 = vadd.f32 %v798, %v810
  %v823 = vadd.f32 %v799, %v812
  %v824 = vadd.f32 %v800, %v815
  %v825 = vadd.f32 %v801, %v817
  %v826 = vmax.f32 %v822, 0.0
  %v827 = vmax.f32 %v823, 0.0
  %v828 = vmax.f32 %v824, 0.0
  %v829 = vmax.f32 %v825, 0.0
  %830 = vst [vmem:[%s4] sm:$0xff] %v826
  %831 = vst [vmem:[%s4 + $0x8] sm:$0xff] %v827
  %832 = vst [vmem:[%s4 + $0x10] sm:$0xff] %v828
  %833 = vst [vmem:[%s4 + $0x18] sm:$0xff] %v829
  // Predicated region
  $region18: #{double_conv.1} parent=0 // pred_check
    _
  $region19: #{double_conv.1} parent=0 // pred_check_branch
    %835 = sbr.rel (0) target = $region21
  $region20: #{double_conv.1} parent=0 // pred_region
    _
  $region21: #{double_conv.1} parent=0 // pred_fallthru
    _
  // Predicated region
  $region22: #{double_conv.1} parent=0 // pred_check
    _
  $region23: #{double_conv.1} parent=0 // pred_check_branch
    %837 = sbr.rel (0) target = $region25
  $region24: #{double_conv.1} parent=0 // pred_region
    _
  $region25: #{double_conv.1} parent=0 // pred_fallthru
    _

</llo_original>
